<compile_context>
chip_gen: v7x
topology: tpu7x:2x2x1
jax: 0.10.0
libtpu: 0.0.40
codegen_flags: <defaults>
</compile_context>

<pallas_src>
import functools

import jax
import jax.numpy as jnp
from jax.experimental import pallas as pl
from jax.experimental.pallas import tpu as pltpu

N_FEATURES = 256
N_REPEAT = 3
N_IN = 15
BN_EPS = 1e-5
SUBLANE = 8


def mlp_kernel(x_ref, w1_ref, b1_ref, w2_ref, gamma_ref, beta_ref,
               w3_ref, b3_ref, o_ref, *, valid_rows):
    x_in = x_ref[...]                                    # (Bp, 15) f32
    b_pad = x_in.shape[0]
    inv_b = 1.0 / valid_rows                             # stats over real rows only

    # Hoisted loads: the repeat loop is unrolled at trace time, so load once.
    w1 = w1_ref[...]                                     # (15, 256)  bf16
    w2 = w2_ref[...]                                     # (256, 256) bf16
    b1 = b1_ref[...]                                     # (1, 256)   f32
    gamma = gamma_ref[...]                               # (1, 256)   f32
    beta = beta_ref[...]                                 # (1, 256)   f32
    w3_row = w3_ref[...]                                 # (1, 256)   f32

    # Row-validity mask, only traced when the batch was padded to a sublane
    # multiple.  Padded rows are forced to zero so they contribute nothing to
    # the training-mode BatchNorm batch statistics.
    need_mask = valid_rows < b_pad
    if need_mask:
        row_ids = jax.lax.broadcasted_iota(jnp.int32, (b_pad, N_FEATURES), 0)
        row_mask = (row_ids < valid_rows).astype(jnp.float32)

    # fc1 + relu (bf16 MXU inputs, f32 accumulate; elementwise stays f32).
    x = jnp.dot(x_in.astype(jnp.bfloat16), w1,
                preferred_element_type=jnp.float32)
    x = jnp.maximum(x + b1, 0.0)                         # (Bp, 256) f32
    if need_mask:
        x = x * row_mask

    # 3x (fc2 -> batchnorm(batch stats) -> relu), shared weights.
    # fc2's bias is intentionally omitted: BN's mean subtraction cancels a
    # per-column bias exactly, so dropping it is a mathematical no-op.
    # TODO(synk): hold w2 stationary in the MXU across the 3 repeats with
    # pltpu.matmul_push_rhs / matmul_acc_lhs / matmul_pop (saves ~2 weight
    # pushes per call); kept on jnp.dot here for portability across
    # v5e (4x128 MXU) / v6e / v7x.
    for r in range(N_REPEAT):
        h = jnp.dot(x.astype(jnp.bfloat16), w2,
                    preferred_element_type=jnp.float32)  # (Bp, 256) f32

        # Batch statistics in f32 on the VPU/XLU (the MXU is the saturating
        # unit -- leave it to the fc matmuls).  Two-pass variance from the
        # centered values avoids the E[h^2]-mean^2 cancellation problem.
        mean = jnp.sum(h, axis=0, keepdims=True) * inv_b          # (1, 256)
        centered = h - mean                                       # (Bp, 256)
        if need_mask:
            centered = centered * row_mask   # padded rows: h==0 -> centered==-mean
        var = jnp.sum(centered * centered, axis=0, keepdims=True) * inv_b
        scale = gamma * jax.lax.rsqrt(var + BN_EPS)      # gamma folded into 1/std

        # Single affine on the centered values: 2 VPU passes over (Bp,256),
        # no materialized (Bp,256) beta buffer.
        x = jnp.maximum(centered * scale + beta, 0.0)
        if need_mask and r + 1 < N_REPEAT:
            x = x * row_mask                 # keep padded rows out of next stats

    # fc3 (out_features = 1): VPU multiply + lane reduction beats an N=1 matmul.
    out = jnp.sum(x * w3_row, axis=-1, keepdims=True)    # (Bp, 1)
    o_ref[...] = out + b3_ref[...] + x_in[:, 0:1]        # bias + residual col 0


def mlp_forward(x_in, params):
    w1, b1, w2, b2, gamma, beta, w3, b3 = params
    del b2  # cancelled exactly by training-mode BN's mean subtraction
    B = x_in.shape[0]

    # Pad the batch to a sublane multiple (avoids masked partial stores and
    # awkward layouts); padded rows are masked out of the BN statistics
    # inside the kernel, so the math is unchanged.
    b_pad = ((B + SUBLANE - 1) // SUBLANE) * SUBLANE
    x_padded = x_in if b_pad == B else jnp.pad(x_in, ((0, b_pad - B), (0, 0)))

    kernel_args = (
        x_padded,
        w1.astype(jnp.bfloat16),          # bf16 MXU weights
        b1,
        w2.astype(jnp.bfloat16),
        gamma,
        beta,
        w3.reshape(1, N_FEATURES),        # row layout for the VPU fc3
        b3,
    )

    # Whole batch resident in one VMEM block because BN needs full-batch stats.
    # Per-row live f32 working set: x, h, centered, centered^2 (~4 KB) + bf16
    # matmul copy (~0.5 KB) + lane-padded x_in (~0.5 KB) ~= 5 KB; budget
    # 7 KB/row (~30% headroom).  Fixed cost (bf16 weights ~140 KB + parameter
    # vectors + compiler internal scratch) budgeted at 4 MiB.  Cap at 75% of
    # the current generation's physical VMEM (v5e/v6e: 128 MiB, v7x: 64 MiB)
    # so compiler temporaries keep headroom; larger batches fail loudly.
    try:
        vmem_cap = int(pltpu.get_tpu_info().vmem_capacity_bytes)
    except Exception:  # conservative fallback if the query is unavailable
        vmem_cap = 64 * 1024 * 1024
    vmem_limit = int(min(vmem_cap * 3 // 4,
                         4 * 1024 * 1024 + b_pad * 7 * 1024))
    # TODO(synk): for very large B (or to use both v7x TensorCores) tile the
    # batch over a parallel grid / pl.core_map and add a two-pass BN with a
    # cross-tile partial-sum reduction (CMEM/VMEM_SHARED + core_barrier).

    vmem_spec = pl.BlockSpec(memory_space=pltpu.MemorySpace.VMEM)
    out = pl.pallas_call(
        functools.partial(mlp_kernel, valid_rows=B),
        out_shape=jax.ShapeDtypeStruct((b_pad, 1), jnp.float32),
        in_specs=[vmem_spec] * len(kernel_args),
        out_specs=vmem_spec,
        compiler_params=pltpu.CompilerParams(vmem_limit_bytes=vmem_limit),
    )(*kernel_args)
    return out[:B] if b_pad != B else out


def init_params(key):
    k1, k2, k3, k4, k5, k6 = jax.random.split(key, 6)

    # PyTorch-style uniform(-1/sqrt(fan_in), 1/sqrt(fan_in)) init, stored as
    # (in_features, out_features) so the kernel computes x @ W + b.
    def lin(kw, kb, fan_in, fan_out):
        bound = 1.0 / jnp.sqrt(fan_in)
        w = jax.random.uniform(kw, (fan_in, fan_out), jnp.float32, -bound, bound)
        b = jax.random.uniform(kb, (1, fan_out), jnp.float32, -bound, bound)
        return w, b

    w1, b1 = lin(k1, k2, N_IN, N_FEATURES)
    w2, b2 = lin(k3, k4, N_FEATURES, N_FEATURES)
    w3, b3 = lin(k5, k6, N_FEATURES, 1)
    gamma = jnp.ones((1, N_FEATURES), jnp.float32)
    beta = jnp.zeros((1, N_FEATURES), jnp.float32)
    return (w1, b1, w2, b2, gamma, beta, w3, b3)


def reference_forward(x_in, params, matmul_dtype=jnp.float32):
    """Pure-JAX reference faithful to the PyTorch module (training-mode BN).

    matmul_dtype lets us build a bf16-matmul-matched reference for a tight
    numerical check of the kernel, in addition to the full-f32 reference.
    """
    w1, b1, w2, b2, gamma, beta, w3, b3 = params

    def mm(a, w):
        return jnp.dot(a.astype(matmul_dtype), w.astype(matmul_dtype),
                       preferred_element_type=jnp.float32)

    x = jnp.maximum(mm(x_in, w1) + b1, 0.0)
    for _ in range(N_REPEAT):
        h = mm(x, w2) + b2
        mean = jnp.mean(h, axis=0, keepdims=True)
        var = jnp.mean((h - mean) ** 2, axis=0, keepdims=True)
        x = jnp.maximum((h - mean) * jax.lax.rsqrt(var + BN_EPS) * gamma + beta,
                        0.0)
    return jnp.dot(x, w3, preferred_element_type=jnp.float32) + b3 + x_in[:, 0:1]


def _check(x_in, params):
    out = jax.block_until_ready(mlp_forward(x_in, params))
    assert out.shape == (x_in.shape[0], 1)

    # Tight check vs a reference that uses the same bf16 matmul inputs
    # (isolates kernel-math correctness from the bf16 precision choice).
    ref_bf16 = reference_forward(x_in, params, matmul_dtype=jnp.bfloat16)
    err_bf16 = jnp.max(jnp.abs(out - ref_bf16))
    assert jnp.allclose(out, ref_bf16, atol=1e-2, rtol=1e-2), (
        f"bf16-matched reference max abs err {err_bf16}")

    # Loose check vs the full-f32 PyTorch-faithful reference (bounds bf16 drift).
    ref_f32 = reference_forward(x_in, params, matmul_dtype=jnp.float32)
    err_f32 = jnp.max(jnp.abs(out - ref_f32))
    assert jnp.allclose(out, ref_f32, atol=1e-1, rtol=1e-1), (
        f"f32 reference max abs err {err_f32}")


if __name__ == "__main__":
    key = jax.random.PRNGKey(0)
    k_x, k_p = jax.random.split(key)
    params = init_params(k_p)

    # Sublane-aligned batch (no padding path).
    x8 = jax.random.normal(k_x, (8, N_IN), jnp.float32)
    _check(x8, params)

    # Non-multiple-of-8 batch: exercises the pad + masked-BN-statistics path.
    x6 = x8[:6]
    _check(x6, params)

    print("KERNEL_OK")
</pallas_src>

<mosaic_0001>
module attributes {stable_mosaic.version = 11 : i64} {
  func.func @mlp_kernel(%arg0: memref<8x15xf32, #tpu.memory_space<vmem>>, %arg1: memref<15x256xbf16, #tpu.memory_space<vmem>>, %arg2: memref<1x256xf32, #tpu.memory_space<vmem>>, %arg3: memref<256x256xbf16, #tpu.memory_space<vmem>>, %arg4: memref<1x256xf32, #tpu.memory_space<vmem>>, %arg5: memref<1x256xf32, #tpu.memory_space<vmem>>, %arg6: memref<1x256xf32, #tpu.memory_space<vmem>>, %arg7: memref<1x1xf32, #tpu.memory_space<vmem>>, %arg8: memref<8x1xf32, #tpu.memory_space<vmem>>) attributes {dimension_semantics = [], scalar_prefetch = 0 : i64, scratch_operands = 0 : i64, tpu.core_type = #tpu.core_type<tc>} {
    %c0 = arith.constant 0 : index
    %c0_0 = arith.constant 0 : index
    %0 = vector.load %arg0[%c0, %c0_0] : memref<8x15xf32, #tpu.memory_space<vmem>>, vector<8x15xf32>
    %c0_1 = arith.constant 0 : index
    %c0_2 = arith.constant 0 : index
    %1 = vector.load %arg1[%c0_1, %c0_2] : memref<15x256xbf16, #tpu.memory_space<vmem>>, vector<15x256xbf16>
    %c0_3 = arith.constant 0 : index
    %c0_4 = arith.constant 0 : index
    %2 = vector.load %arg3[%c0_3, %c0_4] : memref<256x256xbf16, #tpu.memory_space<vmem>>, vector<256x256xbf16>
    %c0_5 = arith.constant 0 : index
    %c0_6 = arith.constant 0 : index
    %3 = vector.load %arg2[%c0_5, %c0_6] : memref<1x256xf32, #tpu.memory_space<vmem>>, vector<1x256xf32>
    %c0_7 = arith.constant 0 : index
    %c0_8 = arith.constant 0 : index
    %4 = vector.load %arg4[%c0_7, %c0_8] : memref<1x256xf32, #tpu.memory_space<vmem>>, vector<1x256xf32>
    %c0_9 = arith.constant 0 : index
    %c0_10 = arith.constant 0 : index
    %5 = vector.load %arg5[%c0_9, %c0_10] : memref<1x256xf32, #tpu.memory_space<vmem>>, vector<1x256xf32>
    %c0_11 = arith.constant 0 : index
    %c0_12 = arith.constant 0 : index
    %6 = vector.load %arg6[%c0_11, %c0_12] : memref<1x256xf32, #tpu.memory_space<vmem>>, vector<1x256xf32>
    %7 = arith.truncf %0 : vector<8x15xf32> to vector<8x15xbf16>
    %cst = arith.constant dense<0.000000e+00> : vector<8x256xf32>
    %8 = tpu.matmul %7, %1, %cst {dimension_numbers = #tpu.dot_dimension_numbers<[1], [0], [0], [1], [0, 0, 1, 1], [], []>} : vector<8x15xbf16>, vector<15x256xbf16>, vector<8x256xf32> -> vector<8x256xf32>
    %9 = vector.broadcast %3 : vector<1x256xf32> to vector<8x256xf32>
    %10 = arith.addf %8, %9 : vector<8x256xf32>
    %cst_13 = arith.constant 0.000000e+00 : f32
    %11 = vector.broadcast %cst_13 : f32 to vector<8x256xf32>
    %12 = arith.maximumf %10, %11 : vector<8x256xf32>
    %13 = arith.truncf %12 : vector<8x256xf32> to vector<8x256xbf16>
    %cst_14 = arith.constant dense<0.000000e+00> : vector<8x256xf32>
    %14 = tpu.matmul %13, %2, %cst_14 {dimension_numbers = #tpu.dot_dimension_numbers<[1], [0], [0], [1], [0, 0, 1, 1], [], []>} : vector<8x256xbf16>, vector<256x256xbf16>, vector<8x256xf32> -> vector<8x256xf32>
    %cst_15 = arith.constant dense<0.000000e+00> : vector<256xf32>
    %15 = vector.multi_reduction <add>, %14, %cst_15 [0] : vector<8x256xf32> to vector<256xf32>
    %16 = vector.shape_cast %15 : vector<256xf32> to vector<1x256xf32>
    %cst_16 = arith.constant 1.250000e-01 : f32
    %17 = vector.broadcast %cst_16 : f32 to vector<1x256xf32>
    %18 = arith.mulf %16, %17 : vector<1x256xf32>
    %19 = vector.broadcast %18 : vector<1x256xf32> to vector<8x256xf32>
    %20 = arith.subf %14, %19 : vector<8x256xf32>
    %21 = arith.mulf %20, %20 : vector<8x256xf32>
    %cst_17 = arith.constant dense<0.000000e+00> : vector<256xf32>
    %22 = vector.multi_reduction <add>, %21, %cst_17 [0] : vector<8x256xf32> to vector<256xf32>
    %23 = vector.shape_cast %22 : vector<256xf32> to vector<1x256xf32>
    %cst_18 = arith.constant 1.250000e-01 : f32
    %24 = vector.broadcast %cst_18 : f32 to vector<1x256xf32>
    %25 = arith.mulf %23, %24 : vector<1x256xf32>
    %cst_19 = arith.constant 9.99999974E-6 : f32
    %26 = vector.broadcast %cst_19 : f32 to vector<1x256xf32>
    %27 = arith.addf %25, %26 : vector<1x256xf32>
    %28 = math.rsqrt %27 : vector<1x256xf32>
    %29 = arith.mulf %4, %28 : vector<1x256xf32>
    %30 = vector.broadcast %29 : vector<1x256xf32> to vector<8x256xf32>
    %31 = arith.mulf %20, %30 : vector<8x256xf32>
    %32 = vector.broadcast %5 : vector<1x256xf32> to vector<8x256xf32>
    %33 = arith.addf %31, %32 : vector<8x256xf32>
    %cst_20 = arith.constant 0.000000e+00 : f32
    %34 = vector.broadcast %cst_20 : f32 to vector<8x256xf32>
    %35 = arith.maximumf %33, %34 : vector<8x256xf32>
    %36 = arith.truncf %35 : vector<8x256xf32> to vector<8x256xbf16>
    %cst_21 = arith.constant dense<0.000000e+00> : vector<8x256xf32>
    %37 = tpu.matmul %36, %2, %cst_21 {dimension_numbers = #tpu.dot_dimension_numbers<[1], [0], [0], [1], [0, 0, 1, 1], [], []>} : vector<8x256xbf16>, vector<256x256xbf16>, vector<8x256xf32> -> vector<8x256xf32>
    %cst_22 = arith.constant dense<0.000000e+00> : vector<256xf32>
    %38 = vector.multi_reduction <add>, %37, %cst_22 [0] : vector<8x256xf32> to vector<256xf32>
    %39 = vector.shape_cast %38 : vector<256xf32> to vector<1x256xf32>
    %cst_23 = arith.constant 1.250000e-01 : f32
    %40 = vector.broadcast %cst_23 : f32 to vector<1x256xf32>
    %41 = arith.mulf %39, %40 : vector<1x256xf32>
    %42 = vector.broadcast %41 : vector<1x256xf32> to vector<8x256xf32>
    %43 = arith.subf %37, %42 : vector<8x256xf32>
    %44 = arith.mulf %43, %43 : vector<8x256xf32>
    %cst_24 = arith.constant dense<0.000000e+00> : vector<256xf32>
    %45 = vector.multi_reduction <add>, %44, %cst_24 [0] : vector<8x256xf32> to vector<256xf32>
    %46 = vector.shape_cast %45 : vector<256xf32> to vector<1x256xf32>
    %cst_25 = arith.constant 1.250000e-01 : f32
    %47 = vector.broadcast %cst_25 : f32 to vector<1x256xf32>
    %48 = arith.mulf %46, %47 : vector<1x256xf32>
    %cst_26 = arith.constant 9.99999974E-6 : f32
    %49 = vector.broadcast %cst_26 : f32 to vector<1x256xf32>
    %50 = arith.addf %48, %49 : vector<1x256xf32>
    %51 = math.rsqrt %50 : vector<1x256xf32>
    %52 = arith.mulf %4, %51 : vector<1x256xf32>
    %53 = vector.broadcast %52 : vector<1x256xf32> to vector<8x256xf32>
    %54 = arith.mulf %43, %53 : vector<8x256xf32>
    %55 = vector.broadcast %5 : vector<1x256xf32> to vector<8x256xf32>
    %56 = arith.addf %54, %55 : vector<8x256xf32>
    %cst_27 = arith.constant 0.000000e+00 : f32
    %57 = vector.broadcast %cst_27 : f32 to vector<8x256xf32>
    %58 = arith.maximumf %56, %57 : vector<8x256xf32>
    %59 = arith.truncf %58 : vector<8x256xf32> to vector<8x256xbf16>
    %cst_28 = arith.constant dense<0.000000e+00> : vector<8x256xf32>
    %60 = tpu.matmul %59, %2, %cst_28 {dimension_numbers = #tpu.dot_dimension_numbers<[1], [0], [0], [1], [0, 0, 1, 1], [], []>} : vector<8x256xbf16>, vector<256x256xbf16>, vector<8x256xf32> -> vector<8x256xf32>
    %cst_29 = arith.constant dense<0.000000e+00> : vector<256xf32>
    %61 = vector.multi_reduction <add>, %60, %cst_29 [0] : vector<8x256xf32> to vector<256xf32>
    %62 = vector.shape_cast %61 : vector<256xf32> to vector<1x256xf32>
    %cst_30 = arith.constant 1.250000e-01 : f32
    %63 = vector.broadcast %cst_30 : f32 to vector<1x256xf32>
    %64 = arith.mulf %62, %63 : vector<1x256xf32>
    %65 = vector.broadcast %64 : vector<1x256xf32> to vector<8x256xf32>
    %66 = arith.subf %60, %65 : vector<8x256xf32>
    %67 = arith.mulf %66, %66 : vector<8x256xf32>
    %cst_31 = arith.constant dense<0.000000e+00> : vector<256xf32>
    %68 = vector.multi_reduction <add>, %67, %cst_31 [0] : vector<8x256xf32> to vector<256xf32>
    %69 = vector.shape_cast %68 : vector<256xf32> to vector<1x256xf32>
    %cst_32 = arith.constant 1.250000e-01 : f32
    %70 = vector.broadcast %cst_32 : f32 to vector<1x256xf32>
    %71 = arith.mulf %69, %70 : vector<1x256xf32>
    %cst_33 = arith.constant 9.99999974E-6 : f32
    %72 = vector.broadcast %cst_33 : f32 to vector<1x256xf32>
    %73 = arith.addf %71, %72 : vector<1x256xf32>
    %74 = math.rsqrt %73 : vector<1x256xf32>
    %75 = arith.mulf %4, %74 : vector<1x256xf32>
    %76 = vector.broadcast %75 : vector<1x256xf32> to vector<8x256xf32>
    %77 = arith.mulf %66, %76 : vector<8x256xf32>
    %78 = vector.broadcast %5 : vector<1x256xf32> to vector<8x256xf32>
    %79 = arith.addf %77, %78 : vector<8x256xf32>
    %cst_34 = arith.constant 0.000000e+00 : f32
    %80 = vector.broadcast %cst_34 : f32 to vector<8x256xf32>
    %81 = arith.maximumf %79, %80 : vector<8x256xf32>
    %82 = vector.broadcast %6 : vector<1x256xf32> to vector<8x256xf32>
    %83 = arith.mulf %81, %82 : vector<8x256xf32>
    %cst_35 = arith.constant dense<0.000000e+00> : vector<8xf32>
    %84 = vector.multi_reduction <add>, %83, %cst_35 [1] : vector<8x256xf32> to vector<8xf32>
    %85 = vector.shape_cast %84 : vector<8xf32> to vector<8x1xf32>
    %c0_36 = arith.constant 0 : index
    %c0_37 = arith.constant 0 : index
    %86 = vector.load %arg7[%c0_36, %c0_37] : memref<1x1xf32, #tpu.memory_space<vmem>>, vector<1x1xf32>
    %87 = vector.broadcast %86 : vector<1x1xf32> to vector<8x1xf32>
    %88 = arith.addf %85, %87 : vector<8x1xf32>
    %89 = vector.extract_strided_slice %0 {offsets = [0, 0], sizes = [8, 1], strides = [1, 1]} : vector<8x15xf32> to vector<8x1xf32>
    %90 = arith.addf %88, %89 : vector<8x1xf32>
    %c0_38 = arith.constant 0 : index
    %c0_39 = arith.constant 0 : index
    %91 = vector.load %arg8[%c0_38, %c0_39] : memref<8x1xf32, #tpu.memory_space<vmem>>, vector<8x1xf32>
    tpu.vector_store %arg8[%c0_38, %c0_39], %90 {strides = array<i32>} : memref<8x1xf32, #tpu.memory_space<vmem>>, vector<8x1xf32>,
    return
  }
}

</mosaic_0001>

<llo_original>
// kernel: tpu_custom_call.1
$region0: #{tpu_custom_call.1}
  #allocation0 [shape = 'u32[]', space=smem, size = 0x4, offset = 0x4, fixed_abs, tag = 'smem constant byte address 0x4 - core index']
  #allocation1 [shape = 'u32[144,128]{1,0:T(1,128)}', space=vmem, size = 0x12000, scoped, tag = 'internal scratch']
  #allocation2 [shape = 'f32[1,1]{1,0:T(1,128)S(1)}', space=vmem, size = 0x200, scoped, tag = 'scoped memory for tpu_custom_call.1']
  %s0 = inlined_call_operand.hbm [shape: f32[8,15], index: 0, kind: input, shape index: {}]
  %s1 = inlined_call_operand.hbm [shape: bf16[15,256], index: 1, kind: input, shape index: {}]
  %s2 = inlined_call_operand.vmem [shape: f32[1,256], index: 2, kind: input, shape index: {}]
  %s3 = inlined_call_operand.hbm [shape: bf16[256,256], index: 3, kind: input, shape index: {}]
  %s4 = inlined_call_operand.vmem [shape: f32[1,256], index: 4, kind: input, shape index: {}]
  %s5 = inlined_call_operand.vmem [shape: f32[1,256], index: 5, kind: input, shape index: {}]
  %s6 = inlined_call_operand.vmem [shape: f32[1,256], index: 6, kind: input, shape index: {}]
  %s7 = inlined_call_operand.<no memory space> [shape: f32[1,1], index: 7, kind: input, shape index: {}]
  %s8 = inlined_call_operand.vmem [shape: f32[8,1], index: 8, kind: output, shape index: {}]
  %s9 = sld [smem:[#allocation0]]
  $region54: #{tpu_custom_call.1} parent=0
    _
  %s11 = ssub.s32 1, %s9
  %s12 = scalar_select 0, %s11, %s9
  %v13 = vstv %s7
  %14 = vst [vmem:[#allocation2] sm:$0x1] %v13
  $region1: #{tpu_custom_call.1} parent=0
    #allocation3 [shape = 'u8[4096]{0}', space=vmem, size = 0x1000, scoped, tag = 'input window, operand 0, single buffered']
    #allocation4 [shape = 's32[1]{0}', space=sflag, size = 0x4, scoped, tag = 'scoped memory for tpu_custom_call.1']
    #allocation5 [shape = 'u8[8192]{0}', space=vmem, size = 0x2000, scoped, tag = 'input window, operand 1, single buffered']
    #allocation6 [shape = 's32[1]{0}', space=sflag, size = 0x4, scoped, tag = 'scoped memory for tpu_custom_call.1']
    #allocation7 [shape = 'u8[131072]{0}', space=vmem, size = 0x20000, scoped, tag = 'input window, operand 3, single buffered']
    %15 = vsyncpa [#allocation4], 0
    %16 = vsyncpa [#allocation6], 0
    // Predicated region
    $region2: #{tpu_custom_call.1} parent=1 // pred_check
      _
    $region3: #{tpu_custom_call.1} parent=1 // pred_check_branch
      %18 = sbr.rel (0) target = $region5
    $region4: #{tpu_custom_call.1} parent=1 // pred_region
      %s20 = ssub.s32 128, 128
      %21 = vsyncadd [#allocation4], %s20
      %s23 = sshll.u32 [#allocation3], 4
      %s24 = int_to_ptr.vmem [resolvable:$true] %s23
      %26 = dma.hbm_to_vmem [thread:$0]  %s0, 128, %s24, [#allocation4]
    $region5: #{tpu_custom_call.1} parent=1 // pred_fallthru
      _
    // Predicated region
    $region6: #{tpu_custom_call.1} parent=1 // pred_check
      _
    $region7: #{tpu_custom_call.1} parent=1 // pred_check_branch
      %28 = sbr.rel (0) target = $region9
    $region8: #{tpu_custom_call.1} parent=1 // pred_region
      %s30 = ssub.s32 256, 256
      %31 = vsyncadd [#allocation6], %s30
      %s32 = sshll.u32 [#allocation5], 4
      %s33 = int_to_ptr.vmem [resolvable:$true] %s32
      %38 = dma.hbm_to_vmem [thread:$0]  %s1, 256, %s33, [#allocation6], 128, 128, 8
    $region9: #{tpu_custom_call.1} parent=1 // pred_fallthru
      _
    // Predicated region
    $region10: #{tpu_custom_call.1} parent=1 // pred_check
      _
    $region11: #{tpu_custom_call.1} parent=1 // pred_check_branch
      %40 = sbr.rel (0) target = $region13
    $region12: #{tpu_custom_call.1} parent=1 // pred_region
      _
    $region13: #{tpu_custom_call.1} parent=1 // pred_fallthru
      _
    // Predicated region
    $region14: #{tpu_custom_call.1} parent=1 // pred_check
      _
    $region15: #{tpu_custom_call.1} parent=1 // pred_check_branch
      %42 = sbr.rel (0) target = $region17
    $region16: #{tpu_custom_call.1} parent=1 // pred_region
      %s44 = ssub.s32 4096, 4096
      %45 = vsyncadd [#allocation6], %s44
      %s46 = sshll.u32 [#allocation7], 4
      %s47 = int_to_ptr.vmem [resolvable:$true] %s46
      %52 = dma.hbm_to_vmem [thread:$0]  %s3, 4096, %s47, [#allocation6], 128, 128, 8
    $region17: #{tpu_custom_call.1} parent=1 // pred_fallthru
      _
    // Predicated region
    $region18: #{tpu_custom_call.1} parent=1 // pred_check
      _
    $region19: #{tpu_custom_call.1} parent=1 // pred_check_branch
      %54 = sbr.rel (0) target = $region21
    $region20: #{tpu_custom_call.1} parent=1 // pred_region
      _
    $region21: #{tpu_custom_call.1} parent=1 // pred_fallthru
      _
    // Predicated region
    $region22: #{tpu_custom_call.1} parent=1 // pred_check
      _
    $region23: #{tpu_custom_call.1} parent=1 // pred_check_branch
      %56 = sbr.rel (0) target = $region25
    $region24: #{tpu_custom_call.1} parent=1 // pred_region
      _
    $region25: #{tpu_custom_call.1} parent=1 // pred_fallthru
      _
    // Predicated region
    $region26: #{tpu_custom_call.1} parent=1 // pred_check
      _
    $region27: #{tpu_custom_call.1} parent=1 // pred_check_branch
      %58 = sbr.rel (0) target = $region29
    $region28: #{tpu_custom_call.1} parent=1 // pred_region
      _
    $region29: #{tpu_custom_call.1} parent=1 // pred_fallthru
      _
    // Predicated region
    $region30: #{tpu_custom_call.1} parent=1 // pred_check
      _
    $region31: #{tpu_custom_call.1} parent=1 // pred_check_branch
      %60 = sbr.rel (0) target = $region33
    $region32: #{tpu_custom_call.1} parent=1 // pred_region
      _
    $region33: #{tpu_custom_call.1} parent=1 // pred_fallthru
      _
    // Predicated region
    $region34: #{tpu_custom_call.1} parent=1 // pred_check
      _
    $region35: #{tpu_custom_call.1} parent=1 // pred_check_branch
      %62 = sbr.rel (0) target = $region37
    $region36: #{tpu_custom_call.1} parent=1 // pred_region
      %63 = dma.done [#allocation4], 128
    $region37: #{tpu_custom_call.1} parent=1 // pred_fallthru
      _
    // Predicated region
    $region38: #{tpu_custom_call.1} parent=1 // pred_check
      _
    $region39: #{tpu_custom_call.1} parent=1 // pred_check_branch
      %65 = sbr.rel (0) target = $region41
    $region40: #{tpu_custom_call.1} parent=1 // pred_region
      %66 = dma.done [#allocation6], 256
    $region41: #{tpu_custom_call.1} parent=1 // pred_fallthru
      _
    // Predicated region
    $region42: #{tpu_custom_call.1} parent=1 // pred_check
      _
    $region43: #{tpu_custom_call.1} parent=1 // pred_check_branch
      %68 = sbr.rel (0) target = $region45
    $region44: #{tpu_custom_call.1} parent=1 // pred_region
      %69 = dma.done [#allocation6], 4096
    $region45: #{tpu_custom_call.1} parent=1 // pred_fallthru
      _
    %v71 = vld [vmem:[#allocation3] sm:$0xff]
    %v72 = vld [vmem:[#allocation5] sm:$0xff]
    %v73 = vld [vmem:[#allocation5 + $0x8] sm:$0xff]
    %v74 = vld [vmem:[#allocation7] sm:$0xff]
    %v75 = vld [vmem:[#allocation7 + $0x8] sm:$0xff]
    %v76 = vld [vmem:[#allocation7 + $0x10] sm:$0xff]
    %v77 = vld [vmem:[#allocation7 + $0x18] sm:$0xff]
    %v78 = vld [vmem:[#allocation7 + $0x20] sm:$0xff]
    %v79 = vld [vmem:[#allocation7 + $0x28] sm:$0xff]
    %v80 = vld [vmem:[#allocation7 + $0x30] sm:$0xff]
    %v81 = vld [vmem:[#allocation7 + $0x38] sm:$0xff]
    %v82 = vld [vmem:[#allocation7 + $0x40] sm:$0xff]
    %v83 = vld [vmem:[#allocation7 + $0x48] sm:$0xff]
    %v84 = vld [vmem:[#allocation7 + $0x50] sm:$0xff]
    %v85 = vld [vmem:[#allocation7 + $0x58] sm:$0xff]
    %v86 = vld [vmem:[#allocation7 + $0x60] sm:$0xff]
    %v87 = vld [vmem:[#allocation7 + $0x68] sm:$0xff]
    %v88 = vld [vmem:[#allocation7 + $0x70] sm:$0xff]
    %v89 = vld [vmem:[#allocation7 + $0x78] sm:$0xff]
    %v90 = vld [vmem:[#allocation7 + $0x80] sm:$0xff]
    %v91 = vld [vmem:[#allocation7 + $0x88] sm:$0xff]
    %v92 = vld [vmem:[#allocation7 + $0x90] sm:$0xff]
    %v93 = vld [vmem:[#allocation7 + $0x98] sm:$0xff]
    %v94 = vld [vmem:[#allocation7 + $0xa0] sm:$0xff]
    %v95 = vld [vmem:[#allocation7 + $0xa8] sm:$0xff]
    %v96 = vld [vmem:[#allocation7 + $0xb0] sm:$0xff]
    %v97 = vld [vmem:[#allocation7 + $0xb8] sm:$0xff]
    %v98 = vld [vmem:[#allocation7 + $0xc0] sm:$0xff]
    %v99 = vld [vmem:[#allocation7 + $0xc8] sm:$0xff]
    %v100 = vld [vmem:[#allocation7 + $0xd0] sm:$0xff]
    %v101 = vld [vmem:[#allocation7 + $0xd8] sm:$0xff]
    %v102 = vld [vmem:[#allocation7 + $0xe0] sm:$0xff]
    %v103 = vld [vmem:[#allocation7 + $0xe8] sm:$0xff]
    %v104 = vld [vmem:[#allocation7 + $0xf0] sm:$0xff]
    %v105 = vld [vmem:[#allocation7 + $0xf8] sm:$0xff]
    %v106 = vld [vmem:[%s2] sm:$0x3]
    %v107 = vld [vmem:[%s4] sm:$0x3]
    %v108 = vld [vmem:[%s5] sm:$0x3]
    %v109 = vld [vmem:[%s6] sm:$0x3]
    %v110 = vpack.c.bf16 %v71, %v71
    %v112 = vlaneseq
    %v113 = vshrl.u32 %v112, 7
    %v114 = vsub.s32 0, %v113
    %v115 = vrot.slane %v106, %v114
    %v116 = vlaneseq
    %v117 = vshrl.u32 %v116, 7
    %v118 = vsub.s32 1, %v117
    %v119 = vrot.slane %v106, %v118
    %v124 = vunpack.c.l.b16 %v72
    %v125 = vunpack.c.h.b16 %v72
    %v126 = vunpack.c.l.b16 %v73
    %v127 = vunpack.c.h.b16 %v73
    %v128 = vpack.c.b16 %v126, %v124
    %v129 = vpack.c.b16 %v127, %v125
    %vm130 = vcmask 121856
    %v132 = vsel %vm130, %v110, 0
    %vm134 = vcmask 1046528
    %vm135 = vcmask 1047552
    %v136 = vsel %vm134, 4294967295, 65535
    %v137 = vsel %vm135, %v136, 0
    %v139 = vand.u32 %v128, %v137
    %v142 = vand.u32 %v129, %v137
    %144 = vmatprep.subr.bf16.mxu0 %v142
    %145 = vmatpush1.bf16.msra.mxu0 %v139
    %146 = vmatprep.subr.bf16.mxu0 0
    %147 = vmatpush1.bf16.msra.mxu0 0
    %148 = vmatprep.subr.bf16.mxu0 0
    %149 = vmatpush1.bf16.msra.mxu0 0
    %150 = vmatprep.subr.bf16.mxu0 0
    %151 = vmatpush1.bf16.msra.mxu0 0
    %152 = vmatprep.subr.bf16.mxu0 0
    %153 = vmatpush1.bf16.msra.mxu0 0
    %154 = vmatprep.subr.bf16.mxu0 0
    %155 = vmatpush1.bf16.msra.mxu0 0
    %156 = vmatprep.subr.bf16.mxu0 0
    %157 = vmatpush1.bf16.msra.mxu0 0
    %158 = vmatprep.subr.bf16.mxu0 0
    %159 = vmatpush1.bf16.msra.mxu0 0
    %160 = vmatprep.subr.bf16.mxu0 0
    %161 = vmatpush1.bf16.msra.mxu0 0
    %162 = vmatprep.subr.bf16.mxu0 0
    %163 = vmatpush1.bf16.msra.mxu0 0
    %164 = vmatprep.subr.bf16.mxu0 0
    %165 = vmatpush1.bf16.msra.mxu0 0
    %166 = vmatprep.subr.bf16.mxu0 0
    %167 = vmatpush1.bf16.msra.mxu0 0
    %168 = vmatprep.subr.bf16.mxu0 0
    %169 = vmatpush1.bf16.msra.mxu0 0
    %170 = vmatprep.subr.bf16.mxu0 0
    %171 = vmatpush1.bf16.msra.mxu0 0
    %172 = vmatprep.subr.bf16.mxu0 0
    %173 = vmatpush1.bf16.msra.mxu0 0
    %174 = vmatprep.subr.bf16.mxu0 0
    %175 = vmatpush1.bf16.msra.mxu0 0
    %176 = vmatprep.mubr.bf16.mxu0 0
    %177 = vmatmul.mubr.bf16.gmra.mrb[0].mxu0 %v132
    %v178 = vpop.f32.mrb[0].mxu0
    %v179 = vadd.f32 %v115, %v178
    %v180 = vpop.f32.mrb[0].mxu0
    %v181 = vadd.f32 %v119, %v180
    %v182 = vpop.f32.mrb[0].mxu0
    %v183 = vpop.f32.mrb[0].mxu0
    %184 = vdwg.mxu0
    %v185 = vmax.f32 %v179, 0.0
    %v186 = vmax.f32 %v181, 0.0
    %v187 = vpack.c.bf16 %v185, %v185
    %v188 = vpack.c.bf16 %v186, %v186
    %v221 = vunpack.c.l.b16 %v74
    %v222 = vunpack.c.h.b16 %v74
    %v223 = vunpack.c.l.b16 %v75
    %v224 = vunpack.c.h.b16 %v75
    %v225 = vunpack.c.l.b16 %v76
    %v226 = vunpack.c.h.b16 %v76
    %v227 = vunpack.c.l.b16 %v77
    %v228 = vunpack.c.h.b16 %v77
    %v229 = vunpack.c.l.b16 %v78
    %v230 = vunpack.c.h.b16 %v78
    %v231 = vunpack.c.l.b16 %v79
    %v232 = vunpack.c.h.b16 %v79
    %v233 = vunpack.c.l.b16 %v80
    %v234 = vunpack.c.h.b16 %v80
    %v235 = vunpack.c.l.b16 %v81
    %v236 = vunpack.c.h.b16 %v81
    %v237 = vunpack.c.l.b16 %v82
    %v238 = vunpack.c.h.b16 %v82
    %v239 = vunpack.c.l.b16 %v83
    %v240 = vunpack.c.h.b16 %v83
    %v241 = vunpack.c.l.b16 %v84
    %v242 = vunpack.c.h.b16 %v84
    %v243 = vunpack.c.l.b16 %v85
    %v244 = vunpack.c.h.b16 %v85
    %v245 = vunpack.c.l.b16 %v86
    %v246 = vunpack.c.h.b16 %v86
    %v247 = vunpack.c.l.b16 %v87
    %v248 = vunpack.c.h.b16 %v87
    %v249 = vunpack.c.l.b16 %v88
    %v250 = vunpack.c.h.b16 %v88
    %v251 = vunpack.c.l.b16 %v89
    %v252 = vunpack.c.h.b16 %v89
    %v253 = vunpack.c.l.b16 %v90
    %v254 = vunpack.c.h.b16 %v90
    %v255 = vunpack.c.l.b16 %v91
    %v256 = vunpack.c.h.b16 %v91
    %v257 = vunpack.c.l.b16 %v92
    %v258 = vunpack.c.h.b16 %v92
    %v259 = vunpack.c.l.b16 %v93
    %v260 = vunpack.c.h.b16 %v93
    %v261 = vunpack.c.l.b16 %v94
    %v262 = vunpack.c.h.b16 %v94
    %v263 = vunpack.c.l.b16 %v95
    %v264 = vunpack.c.h.b16 %v95
    %v265 = vunpack.c.l.b16 %v96
    %v266 = vunpack.c.h.b16 %v96
    %v267 = vunpack.c.l.b16 %v97
    %v268 = vunpack.c.h.b16 %v97
    %v269 = vunpack.c.l.b16 %v98
    %v270 = vunpack.c.h.b16 %v98
    %v271 = vunpack.c.l.b16 %v99
    %v272 = vunpack.c.h.b16 %v99
    %v273 = vunpack.c.l.b16 %v100
    %v274 = vunpack.c.h.b16 %v100
    %v275 = vunpack.c.l.b16 %v101
    %v276 = vunpack.c.h.b16 %v101
    %v277 = vunpack.c.l.b16 %v102
    %v278 = vunpack.c.h.b16 %v102
    %v279 = vunpack.c.l.b16 %v103
    %v280 = vunpack.c.h.b16 %v103
    %v281 = vunpack.c.l.b16 %v104
    %v282 = vunpack.c.h.b16 %v104
    %v283 = vunpack.c.l.b16 %v105
    %v284 = vunpack.c.h.b16 %v105
    %v285 = vpack.c.b16 %v223, %v221
    %v286 = vpack.c.b16 %v224, %v222
    %v287 = vpack.c.b16 %v227, %v225
    %v288 = vpack.c.b16 %v228, %v226
    %v289 = vpack.c.b16 %v231, %v229
    %v290 = vpack.c.b16 %v232, %v230
    %v291 = vpack.c.b16 %v235, %v233
    %v292 = vpack.c.b16 %v236, %v234
    %v293 = vpack.c.b16 %v239, %v237
    %v294 = vpack.c.b16 %v240, %v238
    %v295 = vpack.c.b16 %v243, %v241
    %v296 = vpack.c.b16 %v244, %v242
    %v297 = vpack.c.b16 %v247, %v245
    %v298 = vpack.c.b16 %v248, %v246
    %v299 = vpack.c.b16 %v251, %v249
    %v300 = vpack.c.b16 %v252, %v250
    %v301 = vpack.c.b16 %v255, %v253
    %v302 = vpack.c.b16 %v256, %v254
    %v303 = vpack.c.b16 %v259, %v257
    %v304 = vpack.c.b16 %v260, %v258
    %v305 = vpack.c.b16 %v263, %v261
    %v306 = vpack.c.b16 %v264, %v262
    %v307 = vpack.c.b16 %v267, %v265
    %v308 = vpack.c.b16 %v268, %v266
    %v309 = vpack.c.b16 %v271, %v269
    %v310 = vpack.c.b16 %v272, %v270
    %v311 = vpack.c.b16 %v275, %v273
    %v312 = vpack.c.b16 %v276, %v274
    %v313 = vpack.c.b16 %v279, %v277
    %v314 = vpack.c.b16 %v280, %v278
    %v315 = vpack.c.b16 %v283, %v281
    %v316 = vpack.c.b16 %v284, %v282
    %349 = vmatprep.subr.bf16.mxu0 %v286
    %350 = vmatpush1.bf16.msra.mxu0 %v285
    %351 = vmatprep.subr.bf16.mxu0 %v288
    %352 = vmatpush1.bf16.msra.mxu0 %v287
    %353 = vmatprep.subr.bf16.mxu0 %v290
    %354 = vmatpush1.bf16.msra.mxu0 %v289
    %355 = vmatprep.subr.bf16.mxu0 %v292
    %356 = vmatpush1.bf16.msra.mxu0 %v291
    %357 = vmatprep.subr.bf16.mxu0 %v294
    %358 = vmatpush1.bf16.msra.mxu0 %v293
    %359 = vmatprep.subr.bf16.mxu0 %v296
    %360 = vmatpush1.bf16.msra.mxu0 %v295
    %361 = vmatprep.subr.bf16.mxu0 %v298
    %362 = vmatpush1.bf16.msra.mxu0 %v297
    %363 = vmatprep.subr.bf16.mxu0 %v300
    %364 = vmatpush1.bf16.msra.mxu0 %v299
    %365 = vmatprep.subr.bf16.mxu0 %v302
    %366 = vmatpush1.bf16.msra.mxu0 %v301
    %367 = vmatprep.subr.bf16.mxu0 %v304
    %368 = vmatpush1.bf16.msra.mxu0 %v303
    %369 = vmatprep.subr.bf16.mxu0 %v306
    %370 = vmatpush1.bf16.msra.mxu0 %v305
    %371 = vmatprep.subr.bf16.mxu0 %v308
    %372 = vmatpush1.bf16.msra.mxu0 %v307
    %373 = vmatprep.subr.bf16.mxu0 %v310
    %374 = vmatpush1.bf16.msra.mxu0 %v309
    %375 = vmatprep.subr.bf16.mxu0 %v312
    %376 = vmatpush1.bf16.msra.mxu0 %v311
    %377 = vmatprep.subr.bf16.mxu0 %v314
    %378 = vmatpush1.bf16.msra.mxu0 %v313
    %379 = vmatprep.subr.bf16.mxu0 %v316
    %380 = vmatpush1.bf16.msra.mxu0 %v315
    %381 = vmatprep.mubr.bf16.mxu0 %v188
    %382 = vmatmul.mubr.bf16.gmra.mrb[0].mxu0 %v187
    %v383 = vpop.f32.mrb[0].mxu0
    %v384 = vadd.f32 0.0, %v383
    %v385 = vpop.f32.mrb[0].mxu0
    %v386 = vadd.f32 0.0, %v385
    %v387 = vpop.f32.mrb[0].mxu0
    %v388 = vpop.f32.mrb[0].mxu0
    %389 = vdwg.mxu0
    %v390 = vrot.slane %v384, 4
    %v391 = vadd.f32 %v384, %v390
    %v392 = vrot.slane %v391, 2
    %v393 = vadd.f32 %v391, %v392
    %v394 = vrot.slane %v393, 1
    %v395 = vadd.f32 %v393, %v394
    %v396 = vrot.slane %v386, 4
    %v397 = vadd.f32 %v386, %v396
    %v398 = vrot.slane %v397, 2
    %v399 = vadd.f32 %v397, %v398
    %v400 = vrot.slane %v399, 1
    %v401 = vadd.f32 %v399, %v400
    %v402 = vmul.f32 %v395, 0.125
    %v403 = vmul.f32 %v401, 0.125
    %v404 = vsub.f32 %v384, %v402
    %v405 = vsub.f32 %v386, %v403
    %v406 = vmul.f32 %v404, %v404
    %v407 = vmul.f32 %v405, %v405
    %v408 = vrot.slane %v406, 4
    %v409 = vadd.f32 %v406, %v408
    %v410 = vrot.slane %v409, 2
    %v411 = vadd.f32 %v409, %v410
    %v412 = vrot.slane %v411, 1
    %v413 = vadd.f32 %v411, %v412
    %v414 = vrot.slane %v407, 4
    %v415 = vadd.f32 %v407, %v414
    %v416 = vrot.slane %v415, 2
    %v417 = vadd.f32 %v415, %v416
    %v418 = vrot.slane %v417, 1
    %v419 = vadd.f32 %v417, %v418
    %v420 = vmul.f32 %v413, 0.125
    %v421 = vmul.f32 %v419, 0.125
    %v422 = vadd.f32 %v420, 1e-05
    %v423 = vadd.f32 %v421, 1e-05
    %v424 = vrsqrt.pop %v422
    %v425 = vrsqrt.pop %v423
    %v428 = vcombine.low %v424, %v425
    %v430 = vunpack.c.l.s4 1966171168
    %v431 = vunpack.c.0.s8 %v430
    %v432 = vlaneseq
    %v433 = vshrl.u32 %v432, 7
    %v434 = vsub.s32 %v431, %v433
    %v435 = vrot.slane %v428, %v434
    %v437 = vunpack.c.l.s4 1966171168
    %v438 = vunpack.c.0.s8 %v437
    %v439 = vlaneseq
    %v440 = vshrl.u32 %v439, 7
    %v441 = vsub.s32 %v438, %v440
    %v442 = vrot.slane %v435, %v441
    %v444 = vmul.f32 %v107, %v442
    %v446 = vlaneseq
    %v447 = vshrl.u32 %v446, 7
    %v448 = vsub.s32 0, %v447
    %v449 = vrot.slane %v444, %v448
    %v450 = vlaneseq
    %v451 = vshrl.u32 %v450, 7
    %v452 = vsub.s32 1, %v451
    %v453 = vrot.slane %v444, %v452
    %v456 = vmul.f32 %v404, %v449
    %v457 = vmul.f32 %v405, %v453
    %v459 = vlaneseq
    %v460 = vshrl.u32 %v459, 7
    %v461 = vsub.s32 0, %v460
    %v462 = vrot.slane %v108, %v461
    %v463 = vlaneseq
    %v464 = vshrl.u32 %v463, 7
    %v465 = vsub.s32 1, %v464
    %v466 = vrot.slane %v108, %v465
    %v469 = vadd.f32 %v456, %v462
    %v470 = vadd.f32 %v457, %v466
    %v471 = vmax.f32 %v469, 0.0
    %v472 = vmax.f32 %v470, 0.0
    %v473 = vpack.c.bf16 %v471, %v471
    %v474 = vpack.c.bf16 %v472, %v472
    %475 = vmatprep.subr.bf16.mxu0 %v286
    %476 = vmatpush1.bf16.msra.mxu0 %v285
    %477 = vmatprep.subr.bf16.mxu0 %v288
    %478 = vmatpush1.bf16.msra.mxu0 %v287
    %479 = vmatprep.subr.bf16.mxu0 %v290
    %480 = vmatpush1.bf16.msra.mxu0 %v289
    %481 = vmatprep.subr.bf16.mxu0 %v292
    %482 = vmatpush1.bf16.msra.mxu0 %v291
    %483 = vmatprep.subr.bf16.mxu0 %v294
    %484 = vmatpush1.bf16.msra.mxu0 %v293
    %485 = vmatprep.subr.bf16.mxu0 %v296
    %486 = vmatpush1.bf16.msra.mxu0 %v295
    %487 = vmatprep.subr.bf16.mxu0 %v298
    %488 = vmatpush1.bf16.msra.mxu0 %v297
    %489 = vmatprep.subr.bf16.mxu0 %v300
    %490 = vmatpush1.bf16.msra.mxu0 %v299
    %491 = vmatprep.subr.bf16.mxu0 %v302
    %492 = vmatpush1.bf16.msra.mxu0 %v301
    %493 = vmatprep.subr.bf16.mxu0 %v304
    %494 = vmatpush1.bf16.msra.mxu0 %v303
    %495 = vmatprep.subr.bf16.mxu0 %v306
    %496 = vmatpush1.bf16.msra.mxu0 %v305
    %497 = vmatprep.subr.bf16.mxu0 %v308
    %498 = vmatpush1.bf16.msra.mxu0 %v307
    %499 = vmatprep.subr.bf16.mxu0 %v310
    %500 = vmatpush1.bf16.msra.mxu0 %v309
    %501 = vmatprep.subr.bf16.mxu0 %v312
    %502 = vmatpush1.bf16.msra.mxu0 %v311
    %503 = vmatprep.subr.bf16.mxu0 %v314
    %504 = vmatpush1.bf16.msra.mxu0 %v313
    %505 = vmatprep.subr.bf16.mxu0 %v316
    %506 = vmatpush1.bf16.msra.mxu0 %v315
    %507 = vmatprep.mubr.bf16.mxu0 %v474
    %508 = vmatmul.mubr.bf16.gmra.mrb[0].mxu0 %v473
    %v509 = vpop.f32.mrb[0].mxu0
    %v510 = vadd.f32 0.0, %v509
    %v511 = vpop.f32.mrb[0].mxu0
    %v512 = vadd.f32 0.0, %v511
    %v513 = vpop.f32.mrb[0].mxu0
    %v514 = vpop.f32.mrb[0].mxu0
    %515 = vdwg.mxu0
    %v516 = vrot.slane %v510, 4
    %v517 = vadd.f32 %v510, %v516
    %v518 = vrot.slane %v517, 2
    %v519 = vadd.f32 %v517, %v518
    %v520 = vrot.slane %v519, 1
    %v521 = vadd.f32 %v519, %v520
    %v522 = vrot.slane %v512, 4
    %v523 = vadd.f32 %v512, %v522
    %v524 = vrot.slane %v523, 2
    %v525 = vadd.f32 %v523, %v524
    %v526 = vrot.slane %v525, 1
    %v527 = vadd.f32 %v525, %v526
    %v528 = vmul.f32 %v521, 0.125
    %v529 = vmul.f32 %v527, 0.125
    %v530 = vsub.f32 %v510, %v528
    %v531 = vsub.f32 %v512, %v529
    %v532 = vmul.f32 %v530, %v530
    %v533 = vmul.f32 %v531, %v531
    %v534 = vrot.slane %v532, 4
    %v535 = vadd.f32 %v532, %v534
    %v536 = vrot.slane %v535, 2
    %v537 = vadd.f32 %v535, %v536
    %v538 = vrot.slane %v537, 1
    %v539 = vadd.f32 %v537, %v538
    %v540 = vrot.slane %v533, 4
    %v541 = vadd.f32 %v533, %v540
    %v542 = vrot.slane %v541, 2
    %v543 = vadd.f32 %v541, %v542
    %v544 = vrot.slane %v543, 1
    %v545 = vadd.f32 %v543, %v544
    %v546 = vmul.f32 %v539, 0.125
    %v547 = vmul.f32 %v545, 0.125
    %v548 = vadd.f32 %v546, 1e-05
    %v549 = vadd.f32 %v547, 1e-05
    %v550 = vrsqrt.pop %v548
    %v551 = vrsqrt.pop %v549
    %v554 = vcombine.low %v550, %v551
    %v556 = vunpack.c.l.s4 1966171168
    %v557 = vunpack.c.0.s8 %v556
    %v558 = vlaneseq
    %v559 = vshrl.u32 %v558, 7
    %v560 = vsub.s32 %v557, %v559
    %v561 = vrot.slane %v554, %v560
    %v563 = vunpack.c.l.s4 1966171168
    %v564 = vunpack.c.0.s8 %v563
    %v565 = vlaneseq
    %v566 = vshrl.u32 %v565, 7
    %v567 = vsub.s32 %v564, %v566
    %v568 = vrot.slane %v561, %v567
    %v570 = vmul.f32 %v107, %v568
    %v572 = vlaneseq
    %v573 = vshrl.u32 %v572, 7
    %v574 = vsub.s32 0, %v573
    %v575 = vrot.slane %v570, %v574
    %v576 = vlaneseq
    %v577 = vshrl.u32 %v576, 7
    %v578 = vsub.s32 1, %v577
    %v579 = vrot.slane %v570, %v578
    %v582 = vmul.f32 %v530, %v575
    %v583 = vmul.f32 %v531, %v579
    %v584 = vadd.f32 %v582, %v462
    %v585 = vadd.f32 %v583, %v466
    %v586 = vmax.f32 %v584, 0.0
    %v587 = vmax.f32 %v585, 0.0
    %v588 = vpack.c.bf16 %v586, %v586
    %v589 = vpack.c.bf16 %v587, %v587
    %590 = vmatprep.subr.bf16.mxu0 %v286
    %591 = vmatpush1.bf16.msra.mxu0 %v285
    %592 = vmatprep.subr.bf16.mxu0 %v288
    %593 = vmatpush1.bf16.msra.mxu0 %v287
    %594 = vmatprep.subr.bf16.mxu0 %v290
    %595 = vmatpush1.bf16.msra.mxu0 %v289
    %596 = vmatprep.subr.bf16.mxu0 %v292
    %597 = vmatpush1.bf16.msra.mxu0 %v291
    %598 = vmatprep.subr.bf16.mxu0 %v294
    %599 = vmatpush1.bf16.msra.mxu0 %v293
    %600 = vmatprep.subr.bf16.mxu0 %v296
    %601 = vmatpush1.bf16.msra.mxu0 %v295
    %602 = vmatprep.subr.bf16.mxu0 %v298
    %603 = vmatpush1.bf16.msra.mxu0 %v297
    %604 = vmatprep.subr.bf16.mxu0 %v300
    %605 = vmatpush1.bf16.msra.mxu0 %v299
    %606 = vmatprep.subr.bf16.mxu0 %v302
    %607 = vmatpush1.bf16.msra.mxu0 %v301
    %608 = vmatprep.subr.bf16.mxu0 %v304
    %609 = vmatpush1.bf16.msra.mxu0 %v303
    %610 = vmatprep.subr.bf16.mxu0 %v306
    %611 = vmatpush1.bf16.msra.mxu0 %v305
    %612 = vmatprep.subr.bf16.mxu0 %v308
    %613 = vmatpush1.bf16.msra.mxu0 %v307
    %614 = vmatprep.subr.bf16.mxu0 %v310
    %615 = vmatpush1.bf16.msra.mxu0 %v309
    %616 = vmatprep.subr.bf16.mxu0 %v312
    %617 = vmatpush1.bf16.msra.mxu0 %v311
    %618 = vmatprep.subr.bf16.mxu0 %v314
    %619 = vmatpush1.bf16.msra.mxu0 %v313
    %620 = vmatprep.subr.bf16.mxu0 %v316
    %621 = vmatpush1.bf16.msra.mxu0 %v315
    %622 = vmatprep.mubr.bf16.mxu0 %v589
    %623 = vmatmul.mubr.bf16.gmra.mrb[0].mxu0 %v588
    %v624 = vpop.f32.mrb[0].mxu0
    %v625 = vadd.f32 0.0, %v624
    %v626 = vpop.f32.mrb[0].mxu0
    %v627 = vadd.f32 0.0, %v626
    %v628 = vpop.f32.mrb[0].mxu0
    %v629 = vpop.f32.mrb[0].mxu0
    %630 = vdwg.mxu0
    %v631 = vrot.slane %v625, 4
    %v632 = vadd.f32 %v625, %v631
    %v633 = vrot.slane %v632, 2
    %v634 = vadd.f32 %v632, %v633
    %v635 = vrot.slane %v634, 1
    %v636 = vadd.f32 %v634, %v635
    %v637 = vrot.slane %v627, 4
    %v638 = vadd.f32 %v627, %v637
    %v639 = vrot.slane %v638, 2
    %v640 = vadd.f32 %v638, %v639
    %v641 = vrot.slane %v640, 1
    %v642 = vadd.f32 %v640, %v641
    %v643 = vmul.f32 %v636, 0.125
    %v644 = vmul.f32 %v642, 0.125
    %v645 = vsub.f32 %v625, %v643
    %v646 = vsub.f32 %v627, %v644
    %v647 = vmul.f32 %v645, %v645
    %v648 = vmul.f32 %v646, %v646
    %v649 = vrot.slane %v647, 4
    %v650 = vadd.f32 %v647, %v649
    %v651 = vrot.slane %v650, 2
    %v652 = vadd.f32 %v650, %v651
    %v653 = vrot.slane %v652, 1
    %v654 = vadd.f32 %v652, %v653
    %v655 = vrot.slane %v648, 4
    %v656 = vadd.f32 %v648, %v655
    %v657 = vrot.slane %v656, 2
    %v658 = vadd.f32 %v656, %v657
    %v659 = vrot.slane %v658, 1
    %v660 = vadd.f32 %v658, %v659
    %v661 = vmul.f32 %v654, 0.125
    %v662 = vmul.f32 %v660, 0.125
    %v663 = vadd.f32 %v661, 1e-05
    %v664 = vadd.f32 %v662, 1e-05
    %v665 = vrsqrt.pop %v663
    %v666 = vrsqrt.pop %v664
    %v669 = vcombine.low %v665, %v666
    %v671 = vunpack.c.l.s4 1966171168
    %v672 = vunpack.c.0.s8 %v671
    %v673 = vlaneseq
    %v674 = vshrl.u32 %v673, 7
    %v675 = vsub.s32 %v672, %v674
    %v676 = vrot.slane %v669, %v675
    %v678 = vunpack.c.l.s4 1966171168
    %v679 = vunpack.c.0.s8 %v678
    %v680 = vlaneseq
    %v681 = vshrl.u32 %v680, 7
    %v682 = vsub.s32 %v679, %v681
    %v683 = vrot.slane %v676, %v682
    %v685 = vmul.f32 %v107, %v683
    %v687 = vlaneseq
    %v688 = vshrl.u32 %v687, 7
    %v689 = vsub.s32 0, %v688
    %v690 = vrot.slane %v685, %v689
    %v691 = vlaneseq
    %v692 = vshrl.u32 %v691, 7
    %v693 = vsub.s32 1, %v692
    %v694 = vrot.slane %v685, %v693
    %v697 = vmul.f32 %v645, %v690
    %v698 = vmul.f32 %v646, %v694
    %v699 = vadd.f32 %v697, %v462
    %v700 = vadd.f32 %v698, %v466
    %v701 = vmax.f32 %v699, 0.0
    %v702 = vmax.f32 %v700, 0.0
    %v704 = vlaneseq
    %v705 = vshrl.u32 %v704, 7
    %v706 = vsub.s32 0, %v705
    %v707 = vrot.slane %v109, %v706
    %v708 = vlaneseq
    %v709 = vshrl.u32 %v708, 7
    %v710 = vsub.s32 1, %v709
    %v711 = vrot.slane %v109, %v710
    %v714 = vmul.f32 %v701, %v707
    %v715 = vmul.f32 %v702, %v711
    %v716 = vadd.f32 %v714, %v715
    %717 = vadd.xlane.f32.xlu0 %v716
    %v718 = vpop.xlane.xlu0 %717
    %v719 = vld [vmem:[#allocation2] sm:$0x1]
    %v721 = vlaneseq
    %v722 = vshrl.u32 %v721, 7
    %v723 = vsub.s32 0, %v722
    %v724 = vrot.slane %v719, %v723
    %v726 = vadd.f32 %v718, %v724
    %v727 = vadd.f32 %v726, %v71
    %vm728 = vcmask 7168
    %729 = vst.msk [vmem:[%s8] sm:$0xff] %vm728, %v727
    // Predicated region
    $region46: #{tpu_custom_call.1} parent=1 // pred_check
      _
    $region47: #{tpu_custom_call.1} parent=1 // pred_check_branch
      %731 = sbr.rel (0) target = $region49
    $region48: #{tpu_custom_call.1} parent=1 // pred_region
      _
    $region49: #{tpu_custom_call.1} parent=1 // pred_fallthru
      _
    // Predicated region
    $region50: #{tpu_custom_call.1} parent=1 // pred_check
      _
    $region51: #{tpu_custom_call.1} parent=1 // pred_check_branch
      %733 = sbr.rel (0) target = $region53
    $region52: #{tpu_custom_call.1} parent=1 // pred_region
      _
    $region53: #{tpu_custom_call.1} parent=1 // pred_fallthru
      _
    %734 = vsyncpa [#allocation4], 1
    %735 = vsyncpa [#allocation6], 1

</llo_original>
